<compile_context>
chip_gen: v7x
topology: tpu7x:2x2x1
jax: 0.10.0
libtpu: 0.0.40
codegen_flags: <defaults>
</compile_context>

<pallas_src>
import functools

import jax
import jax.numpy as jnp
from jax import lax
from jax.experimental import pallas as pl
from jax.experimental.pallas import tpu as pltpu

LANE = 128
VMEM_LIMIT = 32 * 1024 * 1024        # safe on v5e/v6e/v7x, >> actual tile needs
FUSED_MAX_NODES = 2048               # n_pad <= this -> single fully-resident kernel


def _round_up(x, m):
    return (x + m - 1) // m * m


# ---------------------------------------------------------------------------
# Glue: COO edges -> dense symmetrically-normalized adjacency (PyG gcn_norm,
# self-loops with weight 1), built directly at the padded size in bf16.
# ---------------------------------------------------------------------------
def build_norm_adj(edge_index, edge_weight, num_nodes, num_nodes_pad):
    row, col = edge_index[0], edge_index[1]          # row = source, col = target
    loop = jnp.arange(num_nodes, dtype=edge_index.dtype)
    row = jnp.concatenate([row, loop])
    col = jnp.concatenate([col, loop])
    ew = jnp.concatenate(
        [edge_weight.astype(jnp.float32), jnp.ones((num_nodes,), jnp.float32)])
    deg = jnp.zeros((num_nodes_pad,), jnp.float32).at[col].add(ew)
    dinv = jnp.where(deg > 0, lax.rsqrt(deg), 0.0)
    norm = dinv[row] * ew * dinv[col]
    a_hat = jnp.zeros((num_nodes_pad, num_nodes_pad), jnp.float32)
    a_hat = a_hat.at[col, row].add(norm)
    return a_hat.astype(jnp.bfloat16)


def _log_softmax_masked(logits, num_classes):
    """Row-wise log_softmax over the first `num_classes` lanes of `logits`."""
    col = lax.broadcasted_iota(jnp.int32, logits.shape, 1)
    valid = col < num_classes
    masked = jnp.where(valid, logits, -jnp.inf)
    m = jnp.max(masked, axis=1, keepdims=True)
    z = masked - m                                   # padded lanes -> -inf
    lse = jnp.log(jnp.sum(jnp.exp(z), axis=1, keepdims=True))
    return jnp.where(valid, z - lse, 0.0)            # keep stores finite


# ---------------------------------------------------------------------------
# Small-graph path: whole forward in one kernel, everything resident in VMEM.
# ---------------------------------------------------------------------------
def fused_kernel(a_ref, x_ref, w1_ref, b1_ref, w2_ref, b2_ref, o_ref, *,
                 num_classes):
    a = a_ref[...]
    xw1 = jnp.dot(x_ref[...], w1_ref[...], preferred_element_type=jnp.float32)
    h = jnp.dot(a, xw1.astype(jnp.bfloat16),
                preferred_element_type=jnp.float32) + b1_ref[...]
    h = jnp.maximum(h, 0.0)
    # TODO(synk): F.dropout(training=True) treated as eval-mode identity.
    hw2 = jnp.dot(h.astype(jnp.bfloat16), w2_ref[...],
                  preferred_element_type=jnp.float32)
    logits = jnp.dot(a, hw2.astype(jnp.bfloat16),
                     preferred_element_type=jnp.float32) + b2_ref[...]
    o_ref[...] = _log_softmax_masked(logits, num_classes)


def gcn_forward_fused(a_hat, x, w1, b1, w2, b2, num_classes):
    n_pad = a_hat.shape[0]
    c_pad = w2.shape[1]
    return pl.pallas_call(
        functools.partial(fused_kernel, num_classes=num_classes),
        out_shape=jax.ShapeDtypeStruct((n_pad, c_pad), jnp.float32),
        grid_spec=pltpu.PrefetchScalarGridSpec(
            num_scalar_prefetch=0,
            grid=(1,),
            in_specs=[
                pl.BlockSpec(a_hat.shape, lambda i: (0, 0)),
                pl.BlockSpec(x.shape, lambda i: (0, 0)),
                pl.BlockSpec(w1.shape, lambda i: (0, 0)),
                pl.BlockSpec(b1.shape, lambda i: (0, 0)),
                pl.BlockSpec(w2.shape, lambda i: (0, 0)),
                pl.BlockSpec(b2.shape, lambda i: (0, 0)),
            ],
            out_specs=pl.BlockSpec((n_pad, c_pad), lambda i: (0, 0)),
        ),
        compiler_params=pltpu.CompilerParams(
            dimension_semantics=("arbitrary",),
            vmem_limit_bytes=VMEM_LIMIT),
    )(a_hat, x, w1, b1, w2, b2)


# ---------------------------------------------------------------------------
# Large-graph path, layer 1:  HW2 = relu((A @ X) @ W1 + b1) @ W2
# A is streamed in (tm, tk) tiles, X in (tk, f_pad) tiles; the f32 accumulator
# holds A@X and the epilogue applies W1, bias, relu and W2 (so the hidden
# activations never touch HBM).
# ---------------------------------------------------------------------------
def prop1_kernel(a_ref, x_ref, w1_ref, b1_ref, w2_ref, o_ref, acc_ref):
    k = pl.program_id(1)

    @pl.when(k == 0)
    def _():
        acc_ref[...] = jnp.zeros_like(acc_ref)

    acc_ref[...] += jnp.dot(a_ref[...], x_ref[...],
                            preferred_element_type=jnp.float32)

    @pl.when(k == pl.num_programs(1) - 1)
    def _():
        ax = acc_ref[...].astype(jnp.bfloat16)           # (tm, f_pad) = A @ X
        h = jnp.dot(ax, w1_ref[...],
                    preferred_element_type=jnp.float32) + b1_ref[...]
        h = jnp.maximum(h, 0.0)
        # TODO(synk): F.dropout(training=True) treated as eval-mode identity.
        o_ref[...] = jnp.dot(h.astype(jnp.bfloat16), w2_ref[...],
                             preferred_element_type=jnp.float32
                             ).astype(o_ref.dtype)


# ---------------------------------------------------------------------------
# Large-graph path, layer 2:  logits = A @ HW2 + b2, masked log_softmax.
# ---------------------------------------------------------------------------
def prop2_kernel(a_ref, hw_ref, b2_ref, o_ref, acc_ref, *, num_classes):
    k = pl.program_id(1)

    @pl.when(k == 0)
    def _():
        acc_ref[...] = jnp.zeros_like(acc_ref)

    acc_ref[...] += jnp.dot(a_ref[...], hw_ref[...],
                            preferred_element_type=jnp.float32)

    @pl.when(k == pl.num_programs(1) - 1)
    def _():
        logits = acc_ref[...] + b2_ref[...]
        o_ref[...] = _log_softmax_masked(logits, num_classes)


def gcn_forward_tiled(a_hat, x, w1, b1, w2, b2, num_classes, tm, tk):
    n_pad = a_hat.shape[0]
    f_pad = x.shape[1]
    h_pad = w1.shape[1]
    c_pad = w2.shape[1]
    grid = (n_pad // tm, n_pad // tk)

    hw2 = pl.pallas_call(
        prop1_kernel,
        out_shape=jax.ShapeDtypeStruct((n_pad, c_pad), jnp.bfloat16),
        grid_spec=pltpu.PrefetchScalarGridSpec(
            num_scalar_prefetch=0,
            grid=grid,
            in_specs=[
                pl.BlockSpec((tm, tk), lambda i, k: (i, k)),       # A tile
                pl.BlockSpec((tk, f_pad), lambda i, k: (k, 0)),    # streamed X
                pl.BlockSpec((f_pad, h_pad), lambda i, k: (0, 0)),
                pl.BlockSpec((1, h_pad), lambda i, k: (0, 0)),
                pl.BlockSpec((h_pad, c_pad), lambda i, k: (0, 0)),
            ],
            out_specs=pl.BlockSpec((tm, c_pad), lambda i, k: (i, 0)),
            scratch_shapes=[pltpu.VMEM((tm, f_pad), jnp.float32)],
        ),
        compiler_params=pltpu.CompilerParams(
            dimension_semantics=("parallel", "arbitrary"),
            vmem_limit_bytes=VMEM_LIMIT),
    )(a_hat, x, w1, b1, w2)

    return pl.pallas_call(
        functools.partial(prop2_kernel, num_classes=num_classes),
        out_shape=jax.ShapeDtypeStruct((n_pad, c_pad), jnp.float32),
        grid_spec=pltpu.PrefetchScalarGridSpec(
            num_scalar_prefetch=0,
            grid=grid,
            in_specs=[
                pl.BlockSpec((tm, tk), lambda i, k: (i, k)),       # A tile
                pl.BlockSpec((tk, c_pad), lambda i, k: (k, 0)),    # streamed HW2
                pl.BlockSpec((1, c_pad), lambda i, k: (0, 0)),
            ],
            out_specs=pl.BlockSpec((tm, c_pad), lambda i, k: (i, 0)),
            scratch_shapes=[pltpu.VMEM((tm, c_pad), jnp.float32)],
        ),
        compiler_params=pltpu.CompilerParams(
            dimension_semantics=("parallel", "arbitrary"),
            vmem_limit_bytes=VMEM_LIMIT),
    )(a_hat, hw2, b2)


def _choose_tiles(n_nodes):
    """Big-tile regime: pad n up to the tile multiple instead of shrinking tiles."""
    n_pad = _round_up(n_nodes, 512)
    tm = 512 if n_pad // 512 >= 2 else 256      # keep row grid >= 2 (v7x megacore)
    tk = 512
    for cand in (2048, 1024, 512):
        if n_pad % cand == 0:
            tk = cand
            break
    return n_pad, tm, tk


# ---------------------------------------------------------------------------
# Full forward: pad, build A_hat, dispatch small/large path, slice result.
# ---------------------------------------------------------------------------
def gcn_forward(x, edge_index, edge_weight, w1, b1, w2, b2, num_classes):
    n, f = x.shape
    hidden = w1.shape[1]
    f_pad = _round_up(f, LANE)
    h_pad = _round_up(hidden, LANE)
    c_pad = _round_up(num_classes, LANE)

    small = _round_up(n, LANE) <= FUSED_MAX_NODES
    if small:
        n_pad = _round_up(n, LANE)
        tm = tk = None
    else:
        n_pad, tm, tk = _choose_tiles(n)

    x_p = jnp.zeros((n_pad, f_pad), jnp.bfloat16).at[:n, :f].set(
        x.astype(jnp.bfloat16))
    w1_p = jnp.zeros((f_pad, h_pad), jnp.bfloat16).at[:f, :hidden].set(
        w1.astype(jnp.bfloat16))
    b1_p = jnp.zeros((1, h_pad), jnp.float32).at[0, :hidden].set(b1)
    w2_p = jnp.zeros((h_pad, c_pad), jnp.bfloat16).at[:hidden, :num_classes].set(
        w2.astype(jnp.bfloat16))
    b2_p = jnp.zeros((1, c_pad), jnp.float32).at[0, :num_classes].set(b2)

    a_hat = build_norm_adj(edge_index, edge_weight, n, n_pad)

    if small:
        out_p = gcn_forward_fused(a_hat, x_p, w1_p, b1_p, w2_p, b2_p, num_classes)
    else:
        out_p = gcn_forward_tiled(a_hat, x_p, w1_p, b1_p, w2_p, b2_p,
                                  num_classes, tm, tk)
    return out_p[:n, :num_classes]


# ---------------------------------------------------------------------------
# Plain-JAX f32 reference (eval-mode forward, same normalization).
# ---------------------------------------------------------------------------
def gcn_reference(x, edge_index, edge_weight, w1, b1, w2, b2):
    n = x.shape[0]
    a = build_norm_adj(edge_index, edge_weight, n, n).astype(jnp.float32)
    h = jnp.maximum(a @ (x @ w1) + b1, 0.0)
    logits = a @ (h @ w2) + b2
    return jax.nn.log_softmax(logits, axis=1)


if __name__ == "__main__":
    key = jax.random.PRNGKey(0)
    num_nodes, num_features, hidden, num_classes = 8, 4, 16, 4
    num_edges = 16
    k1, k2, k3, k4, k5 = jax.random.split(key, 5)

    x = jax.random.normal(k1, (num_nodes, num_features), jnp.float32)
    edge_index = jax.random.randint(
        k2, (2, num_edges), 0, num_nodes, dtype=jnp.int32)
    edge_weight = jax.random.uniform(
        k3, (num_edges,), jnp.float32, minval=0.1, maxval=1.0)

    # Deterministic glorot-like init; GCNConv bias is zero-initialized.
    w1 = jax.random.normal(k4, (num_features, hidden), jnp.float32) * (
        1.0 / jnp.sqrt(num_features))
    b1 = jnp.zeros((hidden,), jnp.float32)
    w2 = jax.random.normal(k5, (hidden, num_classes), jnp.float32) * (
        1.0 / jnp.sqrt(hidden))
    b2 = jnp.zeros((num_classes,), jnp.float32)

    ref = gcn_reference(x, edge_index, edge_weight, w1, b1, w2, b2)

    # Small-graph fused path (what the demo size uses).
    out = gcn_forward(x, edge_index, edge_weight, w1, b1, w2, b2, num_classes)
    jax.block_until_ready(out)
    assert out.shape == (num_nodes, num_classes)
    row_sums = jnp.exp(out).sum(axis=1)
    assert bool(jnp.all(jnp.abs(row_sums - 1.0) < 1e-2)), row_sums
    assert bool(jnp.all(jnp.abs(out - ref) < 1e-1)), (out, ref)

    # Also exercise the large-graph streaming path with small tiles so both
    # grid axes have >1 step (accumulate + epilogue), and cross-check it.
    n_pad2 = 256
    f_pad = _round_up(num_features, LANE)
    h_pad = _round_up(hidden, LANE)
    c_pad = _round_up(num_classes, LANE)
    x_p2 = jnp.zeros((n_pad2, f_pad), jnp.bfloat16).at[
        :num_nodes, :num_features].set(x.astype(jnp.bfloat16))
    w1_p = jnp.zeros((f_pad, h_pad), jnp.bfloat16).at[
        :num_features, :hidden].set(w1.astype(jnp.bfloat16))
    b1_p = jnp.zeros((1, h_pad), jnp.float32).at[0, :hidden].set(b1)
    w2_p = jnp.zeros((h_pad, c_pad), jnp.bfloat16).at[
        :hidden, :num_classes].set(w2.astype(jnp.bfloat16))
    b2_p = jnp.zeros((1, c_pad), jnp.float32).at[0, :num_classes].set(b2)
    a_hat2 = build_norm_adj(edge_index, edge_weight, num_nodes, n_pad2)
    out_tiled = gcn_forward_tiled(
        a_hat2, x_p2, w1_p, b1_p, w2_p, b2_p, num_classes,
        tm=128, tk=128)[:num_nodes, :num_classes]
    jax.block_until_ready(out_tiled)
    assert bool(jnp.all(jnp.abs(out_tiled - ref) < 1e-1)), (out_tiled, ref)

    print("KERNEL_OK")
</pallas_src>

<mosaic_0001>
module attributes {stable_mosaic.version = 11 : i64} {
  func.func @fused_kernel(%arg0: i32, %arg1: memref<128x128xbf16, #tpu.memory_space<vmem>>, %arg2: memref<128x128xbf16, #tpu.memory_space<vmem>>, %arg3: memref<128x128xbf16, #tpu.memory_space<vmem>>, %arg4: memref<1x128xf32, #tpu.memory_space<vmem>>, %arg5: memref<128x128xbf16, #tpu.memory_space<vmem>>, %arg6: memref<1x128xf32, #tpu.memory_space<vmem>>, %arg7: memref<128x128xf32, #tpu.memory_space<vmem>>) attributes {dimension_semantics = [#tpu.dimension_semantics<arbitrary>], iteration_bounds = array<i64: 1>, scalar_prefetch = 0 : i64, scratch_operands = 0 : i64, tpu.core_type = #tpu.core_type<tc>, window_params = [{pipeline_mode = #tpu.pipeline_mode<synchronous>, transform_indices = @transform_0, window_bounds = array<i64: 128, 128>}, {pipeline_mode = #tpu.pipeline_mode<synchronous>, transform_indices = @transform_1, window_bounds = array<i64: 128, 128>}, {pipeline_mode = #tpu.pipeline_mode<synchronous>, transform_indices = @transform_2, window_bounds = array<i64: 128, 128>}, {pipeline_mode = #tpu.pipeline_mode<synchronous>, transform_indices = @transform_3, window_bounds = array<i64: 1, 128>}, {pipeline_mode = #tpu.pipeline_mode<synchronous>, transform_indices = @transform_4, window_bounds = array<i64: 128, 128>}, {pipeline_mode = #tpu.pipeline_mode<synchronous>, transform_indices = @transform_5, window_bounds = array<i64: 1, 128>}, {pipeline_mode = #tpu.pipeline_mode<synchronous>, transform_indices = @transform_6, window_bounds = array<i64: 128, 128>}]} {
    %c0 = arith.constant 0 : index
    %c0_0 = arith.constant 0 : index
    %0 = vector.load %arg1[%c0, %c0_0] : memref<128x128xbf16, #tpu.memory_space<vmem>>, vector<128x128xbf16>
    %c0_1 = arith.constant 0 : index
    %c0_2 = arith.constant 0 : index
    %1 = vector.load %arg2[%c0_1, %c0_2] : memref<128x128xbf16, #tpu.memory_space<vmem>>, vector<128x128xbf16>
    %c0_3 = arith.constant 0 : index
    %c0_4 = arith.constant 0 : index
    %2 = vector.load %arg3[%c0_3, %c0_4] : memref<128x128xbf16, #tpu.memory_space<vmem>>, vector<128x128xbf16>
    %cst = arith.constant dense<0.000000e+00> : vector<128x128xf32>
    %3 = tpu.matmul %1, %2, %cst {dimension_numbers = #tpu.dot_dimension_numbers<[1], [0], [0], [1], [0, 0, 1, 1], [], []>} : vector<128x128xbf16>, vector<128x128xbf16>, vector<128x128xf32> -> vector<128x128xf32>
    %4 = arith.truncf %3 : vector<128x128xf32> to vector<128x128xbf16>
    %cst_5 = arith.constant dense<0.000000e+00> : vector<128x128xf32>
    %5 = tpu.matmul %0, %4, %cst_5 {dimension_numbers = #tpu.dot_dimension_numbers<[1], [0], [0], [1], [0, 0, 1, 1], [], []>} : vector<128x128xbf16>, vector<128x128xbf16>, vector<128x128xf32> -> vector<128x128xf32>
    %c0_6 = arith.constant 0 : index
    %c0_7 = arith.constant 0 : index
    %6 = vector.load %arg4[%c0_6, %c0_7] : memref<1x128xf32, #tpu.memory_space<vmem>>, vector<1x128xf32>
    %7 = vector.broadcast %6 : vector<1x128xf32> to vector<128x128xf32>
    %8 = arith.addf %5, %7 : vector<128x128xf32>
    %cst_8 = arith.constant 0.000000e+00 : f32
    %9 = vector.broadcast %cst_8 : f32 to vector<128x128xf32>
    %10 = arith.maximumf %8, %9 : vector<128x128xf32>
    %11 = arith.truncf %10 : vector<128x128xf32> to vector<128x128xbf16>
    %c0_9 = arith.constant 0 : index
    %c0_10 = arith.constant 0 : index
    %12 = vector.load %arg5[%c0_9, %c0_10] : memref<128x128xbf16, #tpu.memory_space<vmem>>, vector<128x128xbf16>
    %cst_11 = arith.constant dense<0.000000e+00> : vector<128x128xf32>
    %13 = tpu.matmul %11, %12, %cst_11 {dimension_numbers = #tpu.dot_dimension_numbers<[1], [0], [0], [1], [0, 0, 1, 1], [], []>} : vector<128x128xbf16>, vector<128x128xbf16>, vector<128x128xf32> -> vector<128x128xf32>
    %14 = arith.truncf %13 : vector<128x128xf32> to vector<128x128xbf16>
    %cst_12 = arith.constant dense<0.000000e+00> : vector<128x128xf32>
    %15 = tpu.matmul %0, %14, %cst_12 {dimension_numbers = #tpu.dot_dimension_numbers<[1], [0], [0], [1], [0, 0, 1, 1], [], []>} : vector<128x128xbf16>, vector<128x128xbf16>, vector<128x128xf32> -> vector<128x128xf32>
    %c0_13 = arith.constant 0 : index
    %c0_14 = arith.constant 0 : index
    %16 = vector.load %arg6[%c0_13, %c0_14] : memref<1x128xf32, #tpu.memory_space<vmem>>, vector<1x128xf32>
    %17 = vector.broadcast %16 : vector<1x128xf32> to vector<128x128xf32>
    %18 = arith.addf %15, %17 : vector<128x128xf32>
    %19 = tpu.iota {dimensions = array<i32: 1>} : vector<128x128xi32>
    %c4_i32 = arith.constant 4 : i32
    %20 = vector.broadcast %c4_i32 : i32 to vector<128x128xi32>
    %21 = arith.cmpi slt, %19, %20 : vector<128x128xi32>
    %cst_15 = arith.constant 0xFF800000 : f32
    %22 = vector.broadcast %cst_15 : f32 to vector<128x128xf32>
    %23 = arith.select %21, %18, %22 : vector<128x128xi1>, vector<128x128xf32>
    %cst_16 = arith.constant dense<0xFF800000> : vector<128xf32>
    %24 = vector.multi_reduction <maximumf>, %23, %cst_16 [1] : vector<128x128xf32> to vector<128xf32>
    %25 = vector.shape_cast %24 : vector<128xf32> to vector<128x1xf32>
    %26 = vector.broadcast %25 : vector<128x1xf32> to vector<128x128xf32>
    %27 = arith.subf %23, %26 : vector<128x128xf32>
    %28 = math.exp %27 : vector<128x128xf32>
    %cst_17 = arith.constant dense<0.000000e+00> : vector<128xf32>
    %29 = vector.multi_reduction <add>, %28, %cst_17 [1] : vector<128x128xf32> to vector<128xf32>
    %30 = vector.shape_cast %29 : vector<128xf32> to vector<128x1xf32>
    %31 = math.log %30 : vector<128x1xf32>
    %32 = vector.broadcast %31 : vector<128x1xf32> to vector<128x128xf32>
    %33 = arith.subf %27, %32 : vector<128x128xf32>
    %cst_18 = arith.constant 0.000000e+00 : f32
    %34 = vector.broadcast %cst_18 : f32 to vector<128x128xf32>
    %35 = arith.select %21, %33, %34 : vector<128x128xi1>, vector<128x128xf32>
    %c0_19 = arith.constant 0 : index
    %c0_20 = arith.constant 0 : index
    %36 = vector.load %arg7[%c0_19, %c0_20] : memref<128x128xf32, #tpu.memory_space<vmem>>, vector<128x128xf32>
    tpu.vector_store %arg7[%c0_19, %c0_20], %35 {strides = array<i32>} : memref<128x128xf32, #tpu.memory_space<vmem>>, vector<128x128xf32>,
    return
  }
  func.func @transform_0(%arg0: i32) -> (i32, i32) {
    %c0_i32 = arith.constant 0 : i32
    %c0_i32_0 = arith.constant 0 : i32
    %c0_i32_1 = arith.constant 0 : i32
    return %c0_i32, %c0_i32_0 : i32, i32
  }
  func.func @transform_1(%arg0: i32) -> (i32, i32) {
    %c0_i32 = arith.constant 0 : i32
    %c0_i32_0 = arith.constant 0 : i32
    %c0_i32_1 = arith.constant 0 : i32
    return %c0_i32, %c0_i32_0 : i32, i32
  }
  func.func @transform_2(%arg0: i32) -> (i32, i32) {
    %c0_i32 = arith.constant 0 : i32
    %c0_i32_0 = arith.constant 0 : i32
    %c0_i32_1 = arith.constant 0 : i32
    return %c0_i32, %c0_i32_0 : i32, i32
  }
  func.func @transform_3(%arg0: i32) -> (i32, i32) {
    %c0_i32 = arith.constant 0 : i32
    %c0_i32_0 = arith.constant 0 : i32
    %c0_i32_1 = arith.constant 0 : i32
    return %c0_i32, %c0_i32_0 : i32, i32
  }
  func.func @transform_4(%arg0: i32) -> (i32, i32) {
    %c0_i32 = arith.constant 0 : i32
    %c0_i32_0 = arith.constant 0 : i32
    %c0_i32_1 = arith.constant 0 : i32
    return %c0_i32, %c0_i32_0 : i32, i32
  }
  func.func @transform_5(%arg0: i32) -> (i32, i32) {
    %c0_i32 = arith.constant 0 : i32
    %c0_i32_0 = arith.constant 0 : i32
    %c0_i32_1 = arith.constant 0 : i32
    return %c0_i32, %c0_i32_0 : i32, i32
  }
  func.func @transform_6(%arg0: i32) -> (i32, i32) {
    %c0_i32 = arith.constant 0 : i32
    %c0_i32_0 = arith.constant 0 : i32
    %c0_i32_1 = arith.constant 0 : i32
    return %c0_i32, %c0_i32_0 : i32, i32
  }
}

</mosaic_0001>

<llo_original>
// kernel: tpu_custom_call.1
$region0: #{tpu_custom_call.1}
  #allocation0 [shape = 'u32[]', space=smem, size = 0x4, offset = 0x4, fixed_abs, tag = 'smem constant byte address 0x4 - core index']
  #allocation1 [shape = 'u32[144,128]{1,0:T(1,128)}', space=vmem, size = 0x12000, scoped, tag = 'internal scratch']
  %s0 = inlined_call_operand.hbm [shape: bf16[128,128], index: 0, kind: input, shape index: {}]
  %s1 = inlined_call_operand.hbm [shape: bf16[128,128], index: 1, kind: input, shape index: {}]
  %s2 = inlined_call_operand.hbm [shape: bf16[128,128], index: 2, kind: input, shape index: {}]
  %s3 = inlined_call_operand.vmem [shape: f32[1,128], index: 3, kind: input, shape index: {}]
  %s4 = inlined_call_operand.hbm [shape: bf16[128,128], index: 4, kind: input, shape index: {}]
  %s5 = inlined_call_operand.vmem [shape: f32[1,128], index: 5, kind: input, shape index: {}]
  %s6 = inlined_call_operand.hbm [shape: f32[128,128], index: 6, kind: output, shape index: {}]
  %s7 = sld [smem:[#allocation0]]
  $region50: #{tpu_custom_call.1} parent=0
    _
  %s9 = ssub.s32 1, %s7
  %s10 = scalar_select 0, %s9, %s7
  $region1: #{tpu_custom_call.1} parent=0
    #allocation2 [shape = 'u8[32768]{0}', space=vmem, size = 0x8000, scoped, tag = 'input window, operand 0, single buffered']
    #allocation3 [shape = 's32[1]{0}', space=sflag, size = 0x4, scoped, tag = 'scoped memory for tpu_custom_call.1']
    #allocation4 [shape = 's32[1]{0}', space=sflag, size = 0x4, scoped, tag = 'scoped memory for tpu_custom_call.1']
    #allocation5 [shape = 'u8[32768]{0}', space=vmem, size = 0x8000, scoped, tag = 'input window, operand 1, single buffered']
    #allocation6 [shape = 's32[1]{0}', space=sflag, size = 0x4, scoped, tag = 'scoped memory for tpu_custom_call.1']
    #allocation7 [shape = 'u8[32768]{0}', space=vmem, size = 0x8000, scoped, tag = 'input window, operand 2, single buffered']
    #allocation8 [shape = 'u8[32768]{0}', space=vmem, size = 0x8000, scoped, tag = 'input window, operand 4, single buffered']
    #allocation9 [shape = 's32[1]{0}', space=sflag, size = 0x4, scoped, tag = 'scoped memory for tpu_custom_call.1']
    #allocation10 [shape = 'u8[65536]{0}', space=vmem, size = 0x10000, scoped, tag = 'output window, operand 0, single buffered']
    %11 = vsyncpa [#allocation3], 0
    %12 = vsyncpa [#allocation6], 0
    %13 = vsyncpa [#allocation9], 0
    %14 = vsyncpa [#allocation4], 0
    // Predicated region
    $region2: #{tpu_custom_call.1} parent=1 // pred_check
      _
    $region3: #{tpu_custom_call.1} parent=1 // pred_check_branch
      %16 = sbr.rel (0) target = $region5
    $region4: #{tpu_custom_call.1} parent=1 // pred_region
      %s18 = ssub.s32 1024, 1024
      %19 = vsyncadd [#allocation3], %s18
      %s20 = sshll.u32 [#allocation2], 4
      %s21 = int_to_ptr.vmem [resolvable:$true] %s20
      %26 = dma.hbm_to_vmem [thread:$0]  %s0, 1024, %s21, [#allocation3], 64, 64, 4
    $region5: #{tpu_custom_call.1} parent=1 // pred_fallthru
      _
    // Predicated region
    $region6: #{tpu_custom_call.1} parent=1 // pred_check
      _
    $region7: #{tpu_custom_call.1} parent=1 // pred_check_branch
      %28 = sbr.rel (0) target = $region9
    $region8: #{tpu_custom_call.1} parent=1 // pred_region
      %s30 = ssub.s32 1024, 1024
      %31 = vsyncadd [#allocation6], %s30
      %s32 = sshll.u32 [#allocation5], 4
      %s33 = int_to_ptr.vmem [resolvable:$true] %s32
      %38 = dma.hbm_to_vmem [thread:$0]  %s1, 1024, %s33, [#allocation6], 64, 64, 4
    $region9: #{tpu_custom_call.1} parent=1 // pred_fallthru
      _
    // Predicated region
    $region10: #{tpu_custom_call.1} parent=1 // pred_check
      _
    $region11: #{tpu_custom_call.1} parent=1 // pred_check_branch
      %40 = sbr.rel (0) target = $region13
    $region12: #{tpu_custom_call.1} parent=1 // pred_region
      %s42 = ssub.s32 1024, 1024
      %43 = vsyncadd [#allocation6], %s42
      %s44 = sshll.u32 [#allocation7], 4
      %s45 = int_to_ptr.vmem [resolvable:$true] %s44
      %50 = dma.hbm_to_vmem [thread:$0]  %s2, 1024, %s45, [#allocation6], 64, 64, 4
    $region13: #{tpu_custom_call.1} parent=1 // pred_fallthru
      _
    // Predicated region
    $region14: #{tpu_custom_call.1} parent=1 // pred_check
      _
    $region15: #{tpu_custom_call.1} parent=1 // pred_check_branch
      %52 = sbr.rel (0) target = $region17
    $region16: #{tpu_custom_call.1} parent=1 // pred_region
      _
    $region17: #{tpu_custom_call.1} parent=1 // pred_fallthru
      _
    // Predicated region
    $region18: #{tpu_custom_call.1} parent=1 // pred_check
      _
    $region19: #{tpu_custom_call.1} parent=1 // pred_check_branch
      %54 = sbr.rel (0) target = $region21
    $region20: #{tpu_custom_call.1} parent=1 // pred_region
      %s56 = ssub.s32 1024, 1024
      %57 = vsyncadd [#allocation9], %s56
      %s58 = sshll.u32 [#allocation8], 4
      %s59 = int_to_ptr.vmem [resolvable:$true] %s58
      %64 = dma.hbm_to_vmem [thread:$0]  %s4, 1024, %s59, [#allocation9], 64, 64, 4
    $region21: #{tpu_custom_call.1} parent=1 // pred_fallthru
      _
    // Predicated region
    $region22: #{tpu_custom_call.1} parent=1 // pred_check
      _
    $region23: #{tpu_custom_call.1} parent=1 // pred_check_branch
      %66 = sbr.rel (0) target = $region25
    $region24: #{tpu_custom_call.1} parent=1 // pred_region
      _
    $region25: #{tpu_custom_call.1} parent=1 // pred_fallthru
      _
    // Predicated region
    $region26: #{tpu_custom_call.1} parent=1 // pred_check
      _
    $region27: #{tpu_custom_call.1} parent=1 // pred_check_branch
      %68 = sbr.rel (0) target = $region29
    $region28: #{tpu_custom_call.1} parent=1 // pred_region
      %69 = dma.done [#allocation3], 1024
    $region29: #{tpu_custom_call.1} parent=1 // pred_fallthru
      _
    // Predicated region
    $region30: #{tpu_custom_call.1} parent=1 // pred_check
      _
    $region31: #{tpu_custom_call.1} parent=1 // pred_check_branch
      %71 = sbr.rel (0) target = $region33
    $region32: #{tpu_custom_call.1} parent=1 // pred_region
      %72 = dma.done [#allocation6], 1024
    $region33: #{tpu_custom_call.1} parent=1 // pred_fallthru
      _
    // Predicated region
    $region34: #{tpu_custom_call.1} parent=1 // pred_check
      _
    $region35: #{tpu_custom_call.1} parent=1 // pred_check_branch
      %74 = sbr.rel (0) target = $region37
    $region36: #{tpu_custom_call.1} parent=1 // pred_region
      %75 = dma.done [#allocation6], 1024
    $region37: #{tpu_custom_call.1} parent=1 // pred_fallthru
      _
    // Predicated region
    $region38: #{tpu_custom_call.1} parent=1 // pred_check
      _
    $region39: #{tpu_custom_call.1} parent=1 // pred_check_branch
      %77 = sbr.rel (0) target = $region41
    $region40: #{tpu_custom_call.1} parent=1 // pred_region
      %78 = dma.done [#allocation9], 1024
    $region41: #{tpu_custom_call.1} parent=1 // pred_fallthru
      _
    %v80 = vld [vmem:[#allocation2] sm:$0xf]
    %v81 = vld [vmem:[#allocation2 + $0x4] sm:$0xf]
    %v82 = vld [vmem:[#allocation2 + $0x8] sm:$0xf]
    %v83 = vld [vmem:[#allocation2 + $0xc] sm:$0xf]
    %v84 = vld [vmem:[#allocation2 + $0x10] sm:$0xf]
    %v85 = vld [vmem:[#allocation2 + $0x14] sm:$0xf]
    %v86 = vld [vmem:[#allocation2 + $0x18] sm:$0xf]
    %v87 = vld [vmem:[#allocation2 + $0x1c] sm:$0xf]
    %v88 = vld [vmem:[#allocation2 + $0x20] sm:$0xf]
    %v89 = vld [vmem:[#allocation2 + $0x24] sm:$0xf]
    %v90 = vld [vmem:[#allocation2 + $0x28] sm:$0xf]
    %v91 = vld [vmem:[#allocation2 + $0x2c] sm:$0xf]
    %v92 = vld [vmem:[#allocation2 + $0x30] sm:$0xf]
    %v93 = vld [vmem:[#allocation2 + $0x34] sm:$0xf]
    %v94 = vld [vmem:[#allocation2 + $0x38] sm:$0xf]
    %v95 = vld [vmem:[#allocation2 + $0x3c] sm:$0xf]
    %v96 = vld [vmem:[#allocation5] sm:$0xf]
    %v97 = vld [vmem:[#allocation5 + $0x4] sm:$0xf]
    %v98 = vld [vmem:[#allocation5 + $0x8] sm:$0xf]
    %v99 = vld [vmem:[#allocation5 + $0xc] sm:$0xf]
    %v100 = vld [vmem:[#allocation5 + $0x10] sm:$0xf]
    %v101 = vld [vmem:[#allocation5 + $0x14] sm:$0xf]
    %v102 = vld [vmem:[#allocation5 + $0x18] sm:$0xf]
    %v103 = vld [vmem:[#allocation5 + $0x1c] sm:$0xf]
    %v104 = vld [vmem:[#allocation5 + $0x20] sm:$0xf]
    %v105 = vld [vmem:[#allocation5 + $0x24] sm:$0xf]
    %v106 = vld [vmem:[#allocation5 + $0x28] sm:$0xf]
    %v107 = vld [vmem:[#allocation5 + $0x2c] sm:$0xf]
    %v108 = vld [vmem:[#allocation5 + $0x30] sm:$0xf]
    %v109 = vld [vmem:[#allocation5 + $0x34] sm:$0xf]
    %v110 = vld [vmem:[#allocation5 + $0x38] sm:$0xf]
    %v111 = vld [vmem:[#allocation5 + $0x3c] sm:$0xf]
    %v112 = vld [vmem:[#allocation7] sm:$0xf]
    %v113 = vld [vmem:[#allocation7 + $0x4] sm:$0xf]
    %v114 = vld [vmem:[#allocation7 + $0x8] sm:$0xf]
    %v115 = vld [vmem:[#allocation7 + $0xc] sm:$0xf]
    %v116 = vld [vmem:[#allocation7 + $0x10] sm:$0xf]
    %v117 = vld [vmem:[#allocation7 + $0x14] sm:$0xf]
    %v118 = vld [vmem:[#allocation7 + $0x18] sm:$0xf]
    %v119 = vld [vmem:[#allocation7 + $0x1c] sm:$0xf]
    %v120 = vld [vmem:[#allocation7 + $0x20] sm:$0xf]
    %v121 = vld [vmem:[#allocation7 + $0x24] sm:$0xf]
    %v122 = vld [vmem:[#allocation7 + $0x28] sm:$0xf]
    %v123 = vld [vmem:[#allocation7 + $0x2c] sm:$0xf]
    %v124 = vld [vmem:[#allocation7 + $0x30] sm:$0xf]
    %v125 = vld [vmem:[#allocation7 + $0x34] sm:$0xf]
    %v126 = vld [vmem:[#allocation7 + $0x38] sm:$0xf]
    %v127 = vld [vmem:[#allocation7 + $0x3c] sm:$0xf]
    %v144 = vunpack.c.l.b16 %v96
    %v145 = vunpack.c.l.b16 %v97
    %v146 = vunpack.c.l.b16 %v98
    %v147 = vunpack.c.l.b16 %v99
    %v148 = vunpack.c.l.b16 %v100
    %v149 = vunpack.c.l.b16 %v101
    %v150 = vunpack.c.l.b16 %v102
    %v151 = vunpack.c.l.b16 %v103
    %v152 = vunpack.c.l.b16 %v104
    %v153 = vunpack.c.l.b16 %v105
    %v154 = vunpack.c.l.b16 %v106
    %v155 = vunpack.c.l.b16 %v107
    %v156 = vunpack.c.l.b16 %v108
    %v157 = vunpack.c.l.b16 %v109
    %v158 = vunpack.c.l.b16 %v110
    %v159 = vunpack.c.l.b16 %v111
    %v160 = vpack.c.b16 %v145, %v144
    %v161 = vpack.c.b16 %v147, %v146
    %v162 = vpack.c.b16 %v149, %v148
    %v163 = vpack.c.b16 %v151, %v150
    %v164 = vpack.c.b16 %v153, %v152
    %v165 = vpack.c.b16 %v155, %v154
    %v166 = vpack.c.b16 %v157, %v156
    %v167 = vpack.c.b16 %v159, %v158
    %v192 = vunpack.c.l.b16 %v112
    %v193 = vunpack.c.l.b16 %v113
    %v194 = vunpack.c.l.b16 %v114
    %v195 = vunpack.c.l.b16 %v115
    %v196 = vunpack.c.l.b16 %v116
    %v197 = vunpack.c.l.b16 %v117
    %v198 = vunpack.c.l.b16 %v118
    %v199 = vunpack.c.l.b16 %v119
    %v200 = vunpack.c.l.b16 %v120
    %v201 = vunpack.c.l.b16 %v121
    %v202 = vunpack.c.l.b16 %v122
    %v203 = vunpack.c.l.b16 %v123
    %v204 = vunpack.c.l.b16 %v124
    %v205 = vunpack.c.l.b16 %v125
    %v206 = vunpack.c.l.b16 %v126
    %v207 = vunpack.c.l.b16 %v127
    %v208 = vpack.c.b16 %v193, %v192
    %v209 = vpack.c.b16 %v195, %v194
    %v210 = vpack.c.b16 %v197, %v196
    %v211 = vpack.c.b16 %v199, %v198
    %v212 = vpack.c.b16 %v201, %v200
    %v213 = vpack.c.b16 %v203, %v202
    %v214 = vpack.c.b16 %v205, %v204
    %v215 = vpack.c.b16 %v207, %v206
    %224 = vmatprep.subr.bf16.mxu0 0
    %225 = vmatpush1.bf16.msra.mxu0 %v208
    %226 = vmatprep.subr.bf16.mxu0 0
    %227 = vmatpush1.bf16.msra.mxu0 %v209
    %228 = vmatprep.subr.bf16.mxu0 0
    %229 = vmatpush1.bf16.msra.mxu0 %v210
    %230 = vmatprep.subr.bf16.mxu0 0
    %231 = vmatpush1.bf16.msra.mxu0 %v211
    %232 = vmatprep.subr.bf16.mxu0 0
    %233 = vmatpush1.bf16.msra.mxu0 %v212
    %234 = vmatprep.subr.bf16.mxu0 0
    %235 = vmatpush1.bf16.msra.mxu0 %v213
    %236 = vmatprep.subr.bf16.mxu0 0
    %237 = vmatpush1.bf16.msra.mxu0 %v214
    %238 = vmatprep.subr.bf16.mxu0 0
    %239 = vmatpush1.bf16.msra.mxu0 %v215
    %240 = vmatprep.subr.bf16.mxu0 0
    %241 = vmatpush1.bf16.msra.mxu0 0
    %242 = vmatprep.subr.bf16.mxu0 0
    %243 = vmatpush1.bf16.msra.mxu0 0
    %244 = vmatprep.subr.bf16.mxu0 0
    %245 = vmatpush1.bf16.msra.mxu0 0
    %246 = vmatprep.subr.bf16.mxu0 0
    %247 = vmatpush1.bf16.msra.mxu0 0
    %248 = vmatprep.subr.bf16.mxu0 0
    %249 = vmatpush1.bf16.msra.mxu0 0
    %250 = vmatprep.subr.bf16.mxu0 0
    %251 = vmatpush1.bf16.msra.mxu0 0
    %252 = vmatprep.subr.bf16.mxu0 0
    %253 = vmatpush1.bf16.msra.mxu0 0
    %254 = vmatprep.subr.bf16.mxu0 0
    %255 = vmatpush1.bf16.msra.mxu0 0
    %256 = vmatprep.mubr.bf16.mxu0 0
    %257 = vmatmul.mubr.bf16.gmra.mrb[0].mxu0 %v160
    %v258 = vpop.f32.mrb[0].mxu0
    %v259 = vadd.f32 0.0, %v258
    %v260 = vpop.f32.mrb[0].mxu0
    %v261 = vpop.f32.mrb[0].mxu0
    %v262 = vadd.f32 0.0, %v261
    %v263 = vpop.f32.mrb[0].mxu0
    %264 = vmatprep.mubr.bf16.mxu0 0
    %265 = vmatmul.mubr.bf16.gmra.mrb[0].mxu0 %v161
    %v266 = vpop.f32.mrb[0].mxu0
    %v267 = vadd.f32 0.0, %v266
    %v268 = vpop.f32.mrb[0].mxu0
    %v269 = vpop.f32.mrb[0].mxu0
    %v270 = vadd.f32 0.0, %v269
    %v271 = vpop.f32.mrb[0].mxu0
    %272 = vmatprep.mubr.bf16.mxu0 0
    %273 = vmatmul.mubr.bf16.gmra.mrb[0].mxu0 %v162
    %v274 = vpop.f32.mrb[0].mxu0
    %v275 = vadd.f32 0.0, %v274
    %v276 = vpop.f32.mrb[0].mxu0
    %v277 = vpop.f32.mrb[0].mxu0
    %v278 = vadd.f32 0.0, %v277
    %v279 = vpop.f32.mrb[0].mxu0
    %280 = vmatprep.mubr.bf16.mxu0 0
    %281 = vmatmul.mubr.bf16.gmra.mrb[0].mxu0 %v163
    %v282 = vpop.f32.mrb[0].mxu0
    %v283 = vadd.f32 0.0, %v282
    %v284 = vpop.f32.mrb[0].mxu0
    %v285 = vpop.f32.mrb[0].mxu0
    %v286 = vadd.f32 0.0, %v285
    %v287 = vpop.f32.mrb[0].mxu0
    %288 = vmatprep.mubr.bf16.mxu0 0
    %289 = vmatmul.mubr.bf16.gmra.mrb[0].mxu0 %v164
    %v290 = vpop.f32.mrb[0].mxu0
    %v291 = vadd.f32 0.0, %v290
    %v292 = vpop.f32.mrb[0].mxu0
    %v293 = vpop.f32.mrb[0].mxu0
    %v294 = vadd.f32 0.0, %v293
    %v295 = vpop.f32.mrb[0].mxu0
    %296 = vmatprep.mubr.bf16.mxu0 0
    %297 = vmatmul.mubr.bf16.gmra.mrb[0].mxu0 %v165
    %v298 = vpop.f32.mrb[0].mxu0
    %v299 = vadd.f32 0.0, %v298
    %v300 = vpop.f32.mrb[0].mxu0
    %v301 = vpop.f32.mrb[0].mxu0
    %v302 = vadd.f32 0.0, %v301
    %v303 = vpop.f32.mrb[0].mxu0
    %304 = vmatprep.mubr.bf16.mxu0 0
    %305 = vmatmul.mubr.bf16.gmra.mrb[0].mxu0 %v166
    %v306 = vpop.f32.mrb[0].mxu0
    %v307 = vadd.f32 0.0, %v306
    %v308 = vpop.f32.mrb[0].mxu0
    %v309 = vpop.f32.mrb[0].mxu0
    %v310 = vadd.f32 0.0, %v309
    %v311 = vpop.f32.mrb[0].mxu0
    %312 = vmatprep.mubr.bf16.mxu0 0
    %313 = vmatmul.mubr.bf16.gmra.mrb[0].mxu0 %v167
    %v314 = vpop.f32.mrb[0].mxu0
    %v315 = vadd.f32 0.0, %v314
    %v316 = vpop.f32.mrb[0].mxu0
    %v317 = vpop.f32.mrb[0].mxu0
    %v318 = vadd.f32 0.0, %v317
    %v319 = vpop.f32.mrb[0].mxu0
    %320 = vdwg.mxu0
    %v321 = vpack.c.bf16 %v262, %v259
    %v322 = vpack.c.bf16 %v270, %v267
    %v323 = vpack.c.bf16 %v278, %v275
    %v324 = vpack.c.bf16 %v286, %v283
    %v325 = vpack.c.bf16 %v294, %v291
    %v326 = vpack.c.bf16 %v302, %v299
    %v327 = vpack.c.bf16 %v310, %v307
    %v328 = vpack.c.bf16 %v318, %v315
    %v329 = vld [vmem:[%s3] sm:$0x1]
    %v331 = vlaneseq
    %v332 = vshrl.u32 %v331, 7
    %v333 = vsub.s32 0, %v332
    %v334 = vrot.slane %v329, %v333
    %v352 = vunpack.c.l.b16 %v80
    %v353 = vunpack.c.l.b16 %v81
    %v354 = vunpack.c.l.b16 %v82
    %v355 = vunpack.c.l.b16 %v83
    %v356 = vunpack.c.l.b16 %v84
    %v357 = vunpack.c.l.b16 %v85
    %v358 = vunpack.c.l.b16 %v86
    %v359 = vunpack.c.l.b16 %v87
    %v360 = vunpack.c.l.b16 %v88
    %v361 = vunpack.c.l.b16 %v89
    %v362 = vunpack.c.l.b16 %v90
    %v363 = vunpack.c.l.b16 %v91
    %v364 = vunpack.c.l.b16 %v92
    %v365 = vunpack.c.l.b16 %v93
    %v366 = vunpack.c.l.b16 %v94
    %v367 = vunpack.c.l.b16 %v95
    %v368 = vpack.c.b16 %v353, %v352
    %v369 = vpack.c.b16 %v355, %v354
    %v370 = vpack.c.b16 %v357, %v356
    %v371 = vpack.c.b16 %v359, %v358
    %v372 = vpack.c.b16 %v361, %v360
    %v373 = vpack.c.b16 %v363, %v362
    %v374 = vpack.c.b16 %v365, %v364
    %v375 = vpack.c.b16 %v367, %v366
    %384 = vmatprep.subr.bf16.mxu0 0
    %385 = vmatpush1.bf16.msra.mxu0 %v321
    %386 = vmatprep.subr.bf16.mxu0 0
    %387 = vmatpush1.bf16.msra.mxu0 %v322
    %388 = vmatprep.subr.bf16.mxu0 0
    %389 = vmatpush1.bf16.msra.mxu0 %v323
    %390 = vmatprep.subr.bf16.mxu0 0
    %391 = vmatpush1.bf16.msra.mxu0 %v324
    %392 = vmatprep.subr.bf16.mxu0 0
    %393 = vmatpush1.bf16.msra.mxu0 %v325
    %394 = vmatprep.subr.bf16.mxu0 0
    %395 = vmatpush1.bf16.msra.mxu0 %v326
    %396 = vmatprep.subr.bf16.mxu0 0
    %397 = vmatpush1.bf16.msra.mxu0 %v327
    %398 = vmatprep.subr.bf16.mxu0 0
    %399 = vmatpush1.bf16.msra.mxu0 %v328
    %400 = vmatprep.subr.bf16.mxu0 0
    %401 = vmatpush1.bf16.msra.mxu0 0
    %402 = vmatprep.subr.bf16.mxu0 0
    %403 = vmatpush1.bf16.msra.mxu0 0
    %404 = vmatprep.subr.bf16.mxu0 0
    %405 = vmatpush1.bf16.msra.mxu0 0
    %406 = vmatprep.subr.bf16.mxu0 0
    %407 = vmatpush1.bf16.msra.mxu0 0
    %408 = vmatprep.subr.bf16.mxu0 0
    %409 = vmatpush1.bf16.msra.mxu0 0
    %410 = vmatprep.subr.bf16.mxu0 0
    %411 = vmatpush1.bf16.msra.mxu0 0
    %412 = vmatprep.subr.bf16.mxu0 0
    %413 = vmatpush1.bf16.msra.mxu0 0
    %414 = vmatprep.subr.bf16.mxu0 0
    %415 = vmatpush1.bf16.msra.mxu0 0
    %416 = vmatprep.mubr.bf16.mxu0 0
    %417 = vmatmul.mubr.bf16.gmra.mrb[0].mxu0 %v368
    %v418 = vpop.f32.mrb[0].mxu0
    %v419 = vadd.f32 %v334, %v418
    %v420 = vpop.f32.mrb[0].mxu0
    %v421 = vpop.f32.mrb[0].mxu0
    %v422 = vadd.f32 %v334, %v421
    %v423 = vpop.f32.mrb[0].mxu0
    %424 = vmatprep.mubr.bf16.mxu0 0
    %425 = vmatmul.mubr.bf16.gmra.mrb[0].mxu0 %v369
    %v426 = vpop.f32.mrb[0].mxu0
    %v427 = vadd.f32 %v334, %v426
    %v428 = vpop.f32.mrb[0].mxu0
    %v429 = vpop.f32.mrb[0].mxu0
    %v430 = vadd.f32 %v334, %v429
    %v431 = vpop.f32.mrb[0].mxu0
    %432 = vmatprep.mubr.bf16.mxu0 0
    %433 = vmatmul.mubr.bf16.gmra.mrb[0].mxu0 %v370
    %v434 = vpop.f32.mrb[0].mxu0
    %v435 = vadd.f32 %v334, %v434
    %v436 = vpop.f32.mrb[0].mxu0
    %v437 = vpop.f32.mrb[0].mxu0
    %v438 = vadd.f32 %v334, %v437
    %v439 = vpop.f32.mrb[0].mxu0
    %440 = vmatprep.mubr.bf16.mxu0 0
    %441 = vmatmul.mubr.bf16.gmra.mrb[0].mxu0 %v371
    %v442 = vpop.f32.mrb[0].mxu0
    %v443 = vadd.f32 %v334, %v442
    %v444 = vpop.f32.mrb[0].mxu0
    %v445 = vpop.f32.mrb[0].mxu0
    %v446 = vadd.f32 %v334, %v445
    %v447 = vpop.f32.mrb[0].mxu0
    %448 = vmatprep.mubr.bf16.mxu0 0
    %449 = vmatmul.mubr.bf16.gmra.mrb[0].mxu0 %v372
    %v450 = vpop.f32.mrb[0].mxu0
    %v451 = vadd.f32 %v334, %v450
    %v452 = vpop.f32.mrb[0].mxu0
    %v453 = vpop.f32.mrb[0].mxu0
    %v454 = vadd.f32 %v334, %v453
    %v455 = vpop.f32.mrb[0].mxu0
    %456 = vmatprep.mubr.bf16.mxu0 0
    %457 = vmatmul.mubr.bf16.gmra.mrb[0].mxu0 %v373
    %v458 = vpop.f32.mrb[0].mxu0
    %v459 = vadd.f32 %v334, %v458
    %v460 = vpop.f32.mrb[0].mxu0
    %v461 = vpop.f32.mrb[0].mxu0
    %v462 = vadd.f32 %v334, %v461
    %v463 = vpop.f32.mrb[0].mxu0
    %464 = vmatprep.mubr.bf16.mxu0 0
    %465 = vmatmul.mubr.bf16.gmra.mrb[0].mxu0 %v374
    %v466 = vpop.f32.mrb[0].mxu0
    %v467 = vadd.f32 %v334, %v466
    %v468 = vpop.f32.mrb[0].mxu0
    %v469 = vpop.f32.mrb[0].mxu0
    %v470 = vadd.f32 %v334, %v469
    %v471 = vpop.f32.mrb[0].mxu0
    %472 = vmatprep.mubr.bf16.mxu0 0
    %473 = vmatmul.mubr.bf16.gmra.mrb[0].mxu0 %v375
    %v474 = vpop.f32.mrb[0].mxu0
    %v475 = vadd.f32 %v334, %v474
    %v476 = vpop.f32.mrb[0].mxu0
    %v477 = vpop.f32.mrb[0].mxu0
    %v478 = vadd.f32 %v334, %v477
    %v479 = vpop.f32.mrb[0].mxu0
    %480 = vdwg.mxu0
    %v481 = vmax.f32 %v419, 0.0
    %v482 = vmax.f32 %v422, 0.0
    %v483 = vmax.f32 %v427, 0.0
    %v484 = vmax.f32 %v430, 0.0
    %v485 = vmax.f32 %v435, 0.0
    %v486 = vmax.f32 %v438, 0.0
    %v487 = vmax.f32 %v443, 0.0
    %v488 = vmax.f32 %v446, 0.0
    %v489 = vmax.f32 %v451, 0.0
    %v490 = vmax.f32 %v454, 0.0
    %v491 = vmax.f32 %v459, 0.0
    %v492 = vmax.f32 %v462, 0.0
    %v493 = vmax.f32 %v467, 0.0
    %v494 = vmax.f32 %v470, 0.0
    %v495 = vmax.f32 %v475, 0.0
    %v496 = vmax.f32 %v478, 0.0
    %v497 = vpack.c.bf16 %v482, %v481
    %v498 = vpack.c.bf16 %v484, %v483
    %v499 = vpack.c.bf16 %v486, %v485
    %v500 = vpack.c.bf16 %v488, %v487
    %v501 = vpack.c.bf16 %v490, %v489
    %v502 = vpack.c.bf16 %v492, %v491
    %v503 = vpack.c.bf16 %v494, %v493
    %v504 = vpack.c.bf16 %v496, %v495
    %v505 = vld [vmem:[#allocation8] sm:$0xf]
    %v506 = vld [vmem:[#allocation8 + $0x4] sm:$0xf]
    %v507 = vld [vmem:[#allocation8 + $0x8] sm:$0xf]
    %v508 = vld [vmem:[#allocation8 + $0xc] sm:$0xf]
    %v509 = vld [vmem:[#allocation8 + $0x10] sm:$0xf]
    %v510 = vld [vmem:[#allocation8 + $0x14] sm:$0xf]
    %v511 = vld [vmem:[#allocation8 + $0x18] sm:$0xf]
    %v512 = vld [vmem:[#allocation8 + $0x1c] sm:$0xf]
    %v513 = vld [vmem:[#allocation8 + $0x20] sm:$0xf]
    %v514 = vld [vmem:[#allocation8 + $0x24] sm:$0xf]
    %v515 = vld [vmem:[#allocation8 + $0x28] sm:$0xf]
    %v516 = vld [vmem:[#allocation8 + $0x2c] sm:$0xf]
    %v517 = vld [vmem:[#allocation8 + $0x30] sm:$0xf]
    %v518 = vld [vmem:[#allocation8 + $0x34] sm:$0xf]
    %v519 = vld [vmem:[#allocation8 + $0x38] sm:$0xf]
    %v520 = vld [vmem:[#allocation8 + $0x3c] sm:$0xf]
    %v537 = vunpack.c.l.b16 %v505
    %v538 = vunpack.c.l.b16 %v506
    %v539 = vunpack.c.l.b16 %v507
    %v540 = vunpack.c.l.b16 %v508
    %v541 = vunpack.c.l.b16 %v509
    %v542 = vunpack.c.l.b16 %v510
    %v543 = vunpack.c.l.b16 %v511
    %v544 = vunpack.c.l.b16 %v512
    %v545 = vunpack.c.l.b16 %v513
    %v546 = vunpack.c.l.b16 %v514
    %v547 = vunpack.c.l.b16 %v515
    %v548 = vunpack.c.l.b16 %v516
    %v549 = vunpack.c.l.b16 %v517
    %v550 = vunpack.c.l.b16 %v518
    %v551 = vunpack.c.l.b16 %v519
    %v552 = vunpack.c.l.b16 %v520
    %v553 = vpack.c.b16 %v538, %v537
    %v554 = vpack.c.b16 %v540, %v539
    %v555 = vpack.c.b16 %v542, %v541
    %v556 = vpack.c.b16 %v544, %v543
    %v557 = vpack.c.b16 %v546, %v545
    %v558 = vpack.c.b16 %v548, %v547
    %v559 = vpack.c.b16 %v550, %v549
    %v560 = vpack.c.b16 %v552, %v551
    %569 = vmatprep.subr.bf16.mxu0 0
    %570 = vmatpush1.bf16.msra.mxu0 %v553
    %571 = vmatprep.subr.bf16.mxu0 0
    %572 = vmatpush1.bf16.msra.mxu0 %v554
    %573 = vmatprep.subr.bf16.mxu0 0
    %574 = vmatpush1.bf16.msra.mxu0 %v555
    %575 = vmatprep.subr.bf16.mxu0 0
    %576 = vmatpush1.bf16.msra.mxu0 %v556
    %577 = vmatprep.subr.bf16.mxu0 0
    %578 = vmatpush1.bf16.msra.mxu0 %v557
    %579 = vmatprep.subr.bf16.mxu0 0
    %580 = vmatpush1.bf16.msra.mxu0 %v558
    %581 = vmatprep.subr.bf16.mxu0 0
    %582 = vmatpush1.bf16.msra.mxu0 %v559
    %583 = vmatprep.subr.bf16.mxu0 0
    %584 = vmatpush1.bf16.msra.mxu0 %v560
    %585 = vmatprep.subr.bf16.mxu0 0
    %586 = vmatpush1.bf16.msra.mxu0 0
    %587 = vmatprep.subr.bf16.mxu0 0
    %588 = vmatpush1.bf16.msra.mxu0 0
    %589 = vmatprep.subr.bf16.mxu0 0
    %590 = vmatpush1.bf16.msra.mxu0 0
    %591 = vmatprep.subr.bf16.mxu0 0
    %592 = vmatpush1.bf16.msra.mxu0 0
    %593 = vmatprep.subr.bf16.mxu0 0
    %594 = vmatpush1.bf16.msra.mxu0 0
    %595 = vmatprep.subr.bf16.mxu0 0
    %596 = vmatpush1.bf16.msra.mxu0 0
    %597 = vmatprep.subr.bf16.mxu0 0
    %598 = vmatpush1.bf16.msra.mxu0 0
    %599 = vmatprep.subr.bf16.mxu0 0
    %600 = vmatpush1.bf16.msra.mxu0 0
    %601 = vmatprep.mubr.bf16.mxu0 0
    %602 = vmatmul.mubr.bf16.gmra.mrb[0].mxu0 %v497
    %v603 = vpop.f32.mrb[0].mxu0
    %v604 = vadd.f32 0.0, %v603
    %v605 = vpop.f32.mrb[0].mxu0
    %v606 = vpop.f32.mrb[0].mxu0
    %v607 = vadd.f32 0.0, %v606
    %v608 = vpop.f32.mrb[0].mxu0
    %609 = vmatprep.mubr.bf16.mxu0 0
    %610 = vmatmul.mubr.bf16.gmra.mrb[0].mxu0 %v498
    %v611 = vpop.f32.mrb[0].mxu0
    %v612 = vadd.f32 0.0, %v611
    %v613 = vpop.f32.mrb[0].mxu0
    %v614 = vpop.f32.mrb[0].mxu0
    %v615 = vadd.f32 0.0, %v614
    %v616 = vpop.f32.mrb[0].mxu0
    %617 = vmatprep.mubr.bf16.mxu0 0
    %618 = vmatmul.mubr.bf16.gmra.mrb[0].mxu0 %v499
    %v619 = vpop.f32.mrb[0].mxu0
    %v620 = vadd.f32 0.0, %v619
    %v621 = vpop.f32.mrb[0].mxu0
    %v622 = vpop.f32.mrb[0].mxu0
    %v623 = vadd.f32 0.0, %v622
    %v624 = vpop.f32.mrb[0].mxu0
    %625 = vmatprep.mubr.bf16.mxu0 0
    %626 = vmatmul.mubr.bf16.gmra.mrb[0].mxu0 %v500
    %v627 = vpop.f32.mrb[0].mxu0
    %v628 = vadd.f32 0.0, %v627
    %v629 = vpop.f32.mrb[0].mxu0
    %v630 = vpop.f32.mrb[0].mxu0
    %v631 = vadd.f32 0.0, %v630
    %v632 = vpop.f32.mrb[0].mxu0
    %633 = vmatprep.mubr.bf16.mxu0 0
    %634 = vmatmul.mubr.bf16.gmra.mrb[0].mxu0 %v501
    %v635 = vpop.f32.mrb[0].mxu0
    %v636 = vadd.f32 0.0, %v635
    %v637 = vpop.f32.mrb[0].mxu0
    %v638 = vpop.f32.mrb[0].mxu0
    %v639 = vadd.f32 0.0, %v638
    %v640 = vpop.f32.mrb[0].mxu0
    %641 = vmatprep.mubr.bf16.mxu0 0
    %642 = vmatmul.mubr.bf16.gmra.mrb[0].mxu0 %v502
    %v643 = vpop.f32.mrb[0].mxu0
    %v644 = vadd.f32 0.0, %v643
    %v645 = vpop.f32.mrb[0].mxu0
    %v646 = vpop.f32.mrb[0].mxu0
    %v647 = vadd.f32 0.0, %v646
    %v648 = vpop.f32.mrb[0].mxu0
    %649 = vmatprep.mubr.bf16.mxu0 0
    %650 = vmatmul.mubr.bf16.gmra.mrb[0].mxu0 %v503
    %v651 = vpop.f32.mrb[0].mxu0
    %v652 = vadd.f32 0.0, %v651
    %v653 = vpop.f32.mrb[0].mxu0
    %v654 = vpop.f32.mrb[0].mxu0
    %v655 = vadd.f32 0.0, %v654
    %v656 = vpop.f32.mrb[0].mxu0
    %657 = vmatprep.mubr.bf16.mxu0 0
    %658 = vmatmul.mubr.bf16.gmra.mrb[0].mxu0 %v504
    %v659 = vpop.f32.mrb[0].mxu0
    %v660 = vadd.f32 0.0, %v659
    %v661 = vpop.f32.mrb[0].mxu0
    %v662 = vpop.f32.mrb[0].mxu0
    %v663 = vadd.f32 0.0, %v662
    %v664 = vpop.f32.mrb[0].mxu0
    %665 = vdwg.mxu0
    %v666 = vpack.c.bf16 %v607, %v604
    %v667 = vpack.c.bf16 %v615, %v612
    %v668 = vpack.c.bf16 %v623, %v620
    %v669 = vpack.c.bf16 %v631, %v628
    %v670 = vpack.c.bf16 %v639, %v636
    %v671 = vpack.c.bf16 %v647, %v644
    %v672 = vpack.c.bf16 %v655, %v652
    %v673 = vpack.c.bf16 %v663, %v660
    %v674 = vld [vmem:[%s5] sm:$0x1]
    %v676 = vlaneseq
    %v677 = vshrl.u32 %v676, 7
    %v678 = vsub.s32 0, %v677
    %v679 = vrot.slane %v674, %v678
    %681 = vmatprep.subr.bf16.mxu0 0
    %682 = vmatpush1.bf16.msra.mxu0 %v666
    %683 = vmatprep.subr.bf16.mxu0 0
    %684 = vmatpush1.bf16.msra.mxu0 %v667
    %685 = vmatprep.subr.bf16.mxu0 0
    %686 = vmatpush1.bf16.msra.mxu0 %v668
    %687 = vmatprep.subr.bf16.mxu0 0
    %688 = vmatpush1.bf16.msra.mxu0 %v669
    %689 = vmatprep.subr.bf16.mxu0 0
    %690 = vmatpush1.bf16.msra.mxu0 %v670
    %691 = vmatprep.subr.bf16.mxu0 0
    %692 = vmatpush1.bf16.msra.mxu0 %v671
    %693 = vmatprep.subr.bf16.mxu0 0
    %694 = vmatpush1.bf16.msra.mxu0 %v672
    %695 = vmatprep.subr.bf16.mxu0 0
    %696 = vmatpush1.bf16.msra.mxu0 %v673
    %697 = vmatprep.subr.bf16.mxu0 0
    %698 = vmatpush1.bf16.msra.mxu0 0
    %699 = vmatprep.subr.bf16.mxu0 0
    %700 = vmatpush1.bf16.msra.mxu0 0
    %701 = vmatprep.subr.bf16.mxu0 0
    %702 = vmatpush1.bf16.msra.mxu0 0
    %703 = vmatprep.subr.bf16.mxu0 0
    %704 = vmatpush1.bf16.msra.mxu0 0
    %705 = vmatprep.subr.bf16.mxu0 0
    %706 = vmatpush1.bf16.msra.mxu0 0
    %707 = vmatprep.subr.bf16.mxu0 0
    %708 = vmatpush1.bf16.msra.mxu0 0
    %709 = vmatprep.subr.bf16.mxu0 0
    %710 = vmatpush1.bf16.msra.mxu0 0
    %711 = vmatprep.subr.bf16.mxu0 0
    %712 = vmatpush1.bf16.msra.mxu0 0
    %713 = vmatprep.mubr.bf16.mxu0 0
    %714 = vmatmul.mubr.bf16.gmra.mrb[0].mxu0 %v368
    %v715 = vpop.f32.mrb[0].mxu0
    %v716 = vadd.f32 %v679, %v715
    %v717 = vpop.f32.mrb[0].mxu0
    %v718 = vpop.f32.mrb[0].mxu0
    %v719 = vadd.f32 %v679, %v718
    %v720 = vpop.f32.mrb[0].mxu0
    %721 = vmatprep.mubr.bf16.mxu0 0
    %722 = vmatmul.mubr.bf16.gmra.mrb[0].mxu0 %v369
    %v723 = vpop.f32.mrb[0].mxu0
    %v724 = vadd.f32 %v679, %v723
    %v725 = vpop.f32.mrb[0].mxu0
    %v726 = vpop.f32.mrb[0].mxu0
    %v727 = vadd.f32 %v679, %v726
    %v728 = vpop.f32.mrb[0].mxu0
    %729 = vmatprep.mubr.bf16.mxu0 0
    %730 = vmatmul.mubr.bf16.gmra.mrb[0].mxu0 %v370
    %v731 = vpop.f32.mrb[0].mxu0
    %v732 = vadd.f32 %v679, %v731
    %v733 = vpop.f32.mrb[0].mxu0
    %v734 = vpop.f32.mrb[0].mxu0
    %v735 = vadd.f32 %v679, %v734
    %v736 = vpop.f32.mrb[0].mxu0
    %737 = vmatprep.mubr.bf16.mxu0 0
    %738 = vmatmul.mubr.bf16.gmra.mrb[0].mxu0 %v371
    %v739 = vpop.f32.mrb[0].mxu0
    %v740 = vadd.f32 %v679, %v739
    %v741 = vpop.f32.mrb[0].mxu0
    %v742 = vpop.f32.mrb[0].mxu0
    %v743 = vadd.f32 %v679, %v742
    %v744 = vpop.f32.mrb[0].mxu0
    %745 = vmatprep.mubr.bf16.mxu0 0
    %746 = vmatmul.mubr.bf16.gmra.mrb[0].mxu0 %v372
    %v747 = vpop.f32.mrb[0].mxu0
    %v748 = vadd.f32 %v679, %v747
    %v749 = vpop.f32.mrb[0].mxu0
    %v750 = vpop.f32.mrb[0].mxu0
    %v751 = vadd.f32 %v679, %v750
    %v752 = vpop.f32.mrb[0].mxu0
    %753 = vmatprep.mubr.bf16.mxu0 0
    %754 = vmatmul.mubr.bf16.gmra.mrb[0].mxu0 %v373
    %v755 = vpop.f32.mrb[0].mxu0
    %v756 = vadd.f32 %v679, %v755
    %v757 = vpop.f32.mrb[0].mxu0
    %v758 = vpop.f32.mrb[0].mxu0
    %v759 = vadd.f32 %v679, %v758
    %v760 = vpop.f32.mrb[0].mxu0
    %761 = vmatprep.mubr.bf16.mxu0 0
    %762 = vmatmul.mubr.bf16.gmra.mrb[0].mxu0 %v374
    %v763 = vpop.f32.mrb[0].mxu0
    %v764 = vadd.f32 %v679, %v763
    %v765 = vpop.f32.mrb[0].mxu0
    %v766 = vpop.f32.mrb[0].mxu0
    %v767 = vadd.f32 %v679, %v766
    %v768 = vpop.f32.mrb[0].mxu0
    %769 = vmatprep.mubr.bf16.mxu0 0
    %770 = vmatmul.mubr.bf16.gmra.mrb[0].mxu0 %v375
    %v771 = vpop.f32.mrb[0].mxu0
    %v772 = vadd.f32 %v679, %v771
    %v773 = vpop.f32.mrb[0].mxu0
    %v774 = vpop.f32.mrb[0].mxu0
    %v775 = vadd.f32 %v679, %v774
    %v776 = vpop.f32.mrb[0].mxu0
    %777 = vdwg.mxu0
    %v778 = vlaneseq
    %v779 = vand.u32 %v778, 127
    %vm780 = vcmp.lt.s32.totalorder %v779, 4
    %v781 = vsel %vm780, %v716, -inf
    %v782 = vsel %vm780, %v719, -inf
    %v783 = vsel %vm780, %v724, -inf
    %v784 = vsel %vm780, %v727, -inf
    %v785 = vsel %vm780, %v732, -inf
    %v786 = vsel %vm780, %v735, -inf
    %v787 = vsel %vm780, %v740, -inf
    %v788 = vsel %vm780, %v743, -inf
    %v789 = vsel %vm780, %v748, -inf
    %v790 = vsel %vm780, %v751, -inf
    %v791 = vsel %vm780, %v756, -inf
    %v792 = vsel %vm780, %v759, -inf
    %v793 = vsel %vm780, %v764, -inf
    %v794 = vsel %vm780, %v767, -inf
    %v795 = vsel %vm780, %v772, -inf
    %v796 = vsel %vm780, %v775, -inf
    %797 = vmax.xlane.f32.xlu0 %v781
    %v798 = vpop.xlane.xlu0 %797
    %799 = vmax.xlane.f32.xlu0 %v782
    %v800 = vpop.xlane.xlu0 %799
    %801 = vmax.xlane.f32.xlu0 %v783
    %v802 = vpop.xlane.xlu0 %801
    %803 = vmax.xlane.f32.xlu0 %v784
    %v804 = vpop.xlane.xlu0 %803
    %805 = vmax.xlane.f32.xlu0 %v785
    %v806 = vpop.xlane.xlu0 %805
    %807 = vmax.xlane.f32.xlu0 %v786
    %v808 = vpop.xlane.xlu0 %807
    %809 = vmax.xlane.f32.xlu0 %v787
    %v810 = vpop.xlane.xlu0 %809
    %811 = vmax.xlane.f32.xlu0 %v788
    %v812 = vpop.xlane.xlu0 %811
    %813 = vmax.xlane.f32.xlu0 %v789
    %v814 = vpop.xlane.xlu0 %813
    %815 = vmax.xlane.f32.xlu0 %v790
    %v816 = vpop.xlane.xlu0 %815
    %817 = vmax.xlane.f32.xlu0 %v791
    %v818 = vpop.xlane.xlu0 %817
    %819 = vmax.xlane.f32.xlu0 %v792
    %v820 = vpop.xlane.xlu0 %819
    %821 = vmax.xlane.f32.xlu0 %v793
    %v822 = vpop.xlane.xlu0 %821
    %823 = vmax.xlane.f32.xlu0 %v794
    %v824 = vpop.xlane.xlu0 %823
    %825 = vmax.xlane.f32.xlu0 %v795
    %v826 = vpop.xlane.xlu0 %825
    %827 = vmax.xlane.f32.xlu0 %v796
    %v828 = vpop.xlane.xlu0 %827
    %v829 = vsub.f32 %v781, %v798
    %v830 = vsub.f32 %v782, %v800
    %v831 = vsub.f32 %v783, %v802
    %v832 = vsub.f32 %v784, %v804
    %v833 = vsub.f32 %v785, %v806
    %v834 = vsub.f32 %v786, %v808
    %v835 = vsub.f32 %v787, %v810
    %v836 = vsub.f32 %v788, %v812
    %v837 = vsub.f32 %v789, %v814
    %v838 = vsub.f32 %v790, %v816
    %v839 = vsub.f32 %v791, %v818
    %v840 = vsub.f32 %v792, %v820
    %v841 = vsub.f32 %v793, %v822
    %v842 = vsub.f32 %v794, %v824
    %v843 = vsub.f32 %v795, %v826
    %v844 = vsub.f32 %v796, %v828
    %v845 = vmul.f32 %v829, 1.442695
    %v846 = vpow.pop %v845
    %v847 = vmul.f32 %v830, 1.442695
    %v848 = vpow.pop %v847
    %v849 = vmul.f32 %v831, 1.442695
    %v850 = vpow.pop %v849
    %v851 = vmul.f32 %v832, 1.442695
    %v852 = vpow.pop %v851
    %v853 = vmul.f32 %v833, 1.442695
    %v854 = vpow.pop %v853
    %v855 = vmul.f32 %v834, 1.442695
    %v856 = vpow.pop %v855
    %v857 = vmul.f32 %v835, 1.442695
    %v858 = vpow.pop %v857
    %v859 = vmul.f32 %v836, 1.442695
    %v860 = vpow.pop %v859
    %v861 = vmul.f32 %v837, 1.442695
    %v862 = vpow.pop %v861
    %v863 = vmul.f32 %v838, 1.442695
    %v864 = vpow.pop %v863
    %v865 = vmul.f32 %v839, 1.442695
    %v866 = vpow.pop %v865
    %v867 = vmul.f32 %v840, 1.442695
    %v868 = vpow.pop %v867
    %v869 = vmul.f32 %v841, 1.442695
    %v870 = vpow.pop %v869
    %v871 = vmul.f32 %v842, 1.442695
    %v872 = vpow.pop %v871
    %v873 = vmul.f32 %v843, 1.442695
    %v874 = vpow.pop %v873
    %v875 = vmul.f32 %v844, 1.442695
    %v876 = vpow.pop %v875
    %877 = vadd.xlane.f32.xlu0 %v846
    %v878 = vpop.xlane.xlu0 %877
    %879 = vadd.xlane.f32.xlu0 %v848
    %v880 = vpop.xlane.xlu0 %879
    %881 = vadd.xlane.f32.xlu0 %v850
    %v882 = vpop.xlane.xlu0 %881
    %883 = vadd.xlane.f32.xlu0 %v852
    %v884 = vpop.xlane.xlu0 %883
    %885 = vadd.xlane.f32.xlu0 %v854
    %v886 = vpop.xlane.xlu0 %885
    %887 = vadd.xlane.f32.xlu0 %v856
    %v888 = vpop.xlane.xlu0 %887
    %889 = vadd.xlane.f32.xlu0 %v858
    %v890 = vpop.xlane.xlu0 %889
    %891 = vadd.xlane.f32.xlu0 %v860
    %v892 = vpop.xlane.xlu0 %891
    %893 = vadd.xlane.f32.xlu0 %v862
    %v894 = vpop.xlane.xlu0 %893
    %895 = vadd.xlane.f32.xlu0 %v864
    %v896 = vpop.xlane.xlu0 %895
    %897 = vadd.xlane.f32.xlu0 %v866
    %v898 = vpop.xlane.xlu0 %897
    %899 = vadd.xlane.f32.xlu0 %v868
    %v900 = vpop.xlane.xlu0 %899
    %901 = vadd.xlane.f32.xlu0 %v870
    %v902 = vpop.xlane.xlu0 %901
    %903 = vadd.xlane.f32.xlu0 %v872
    %v904 = vpop.xlane.xlu0 %903
    %905 = vadd.xlane.f32.xlu0 %v874
    %v906 = vpop.xlane.xlu0 %905
    %907 = vadd.xlane.f32.xlu0 %v876
    %v908 = vpop.xlane.xlu0 %907
    %v909 = vlog2.pop %v878
    %v910 = vmul.f32 %v909, 0.6931472
    %v911 = vlog2.pop %v880
    %v912 = vmul.f32 %v911, 0.6931472
    %v913 = vlog2.pop %v882
    %v914 = vmul.f32 %v913, 0.6931472
    %v915 = vlog2.pop %v884
    %v916 = vmul.f32 %v915, 0.6931472
    %v917 = vlog2.pop %v886
    %v918 = vmul.f32 %v917, 0.6931472
    %v919 = vlog2.pop %v888
    %v920 = vmul.f32 %v919, 0.6931472
    %v921 = vlog2.pop %v890
    %v922 = vmul.f32 %v921, 0.6931472
    %v923 = vlog2.pop %v892
    %v924 = vmul.f32 %v923, 0.6931472
    %v925 = vlog2.pop %v894
    %v926 = vmul.f32 %v925, 0.6931472
    %v927 = vlog2.pop %v896
    %v928 = vmul.f32 %v927, 0.6931472
    %v929 = vlog2.pop %v898
    %v930 = vmul.f32 %v929, 0.6931472
    %v931 = vlog2.pop %v900
    %v932 = vmul.f32 %v931, 0.6931472
    %v933 = vlog2.pop %v902
    %v934 = vmul.f32 %v933, 0.6931472
    %v935 = vlog2.pop %v904
    %v936 = vmul.f32 %v935, 0.6931472
    %v937 = vlog2.pop %v906
    %v938 = vmul.f32 %v937, 0.6931472
    %v939 = vlog2.pop %v908
    %v940 = vmul.f32 %v939, 0.6931472
    %v941 = vsub.f32 %v829, %v910
    %v942 = vsub.f32 %v830, %v912
    %v943 = vsub.f32 %v831, %v914
    %v944 = vsub.f32 %v832, %v916
    %v945 = vsub.f32 %v833, %v918
    %v946 = vsub.f32 %v834, %v920
    %v947 = vsub.f32 %v835, %v922
    %v948 = vsub.f32 %v836, %v924
    %v949 = vsub.f32 %v837, %v926
    %v950 = vsub.f32 %v838, %v928
    %v951 = vsub.f32 %v839, %v930
    %v952 = vsub.f32 %v840, %v932
    %v953 = vsub.f32 %v841, %v934
    %v954 = vsub.f32 %v842, %v936
    %v955 = vsub.f32 %v843, %v938
    %v956 = vsub.f32 %v844, %v940
    %v957 = vsel %vm780, %v941, 0.0
    %v958 = vsel %vm780, %v942, 0.0
    %v959 = vsel %vm780, %v943, 0.0
    %v960 = vsel %vm780, %v944, 0.0
    %v961 = vsel %vm780, %v945, 0.0
    %v962 = vsel %vm780, %v946, 0.0
    %v963 = vsel %vm780, %v947, 0.0
    %v964 = vsel %vm780, %v948, 0.0
    %v965 = vsel %vm780, %v949, 0.0
    %v966 = vsel %vm780, %v950, 0.0
    %v967 = vsel %vm780, %v951, 0.0
    %v968 = vsel %vm780, %v952, 0.0
    %v969 = vsel %vm780, %v953, 0.0
    %v970 = vsel %vm780, %v954, 0.0
    %v971 = vsel %vm780, %v955, 0.0
    %v972 = vsel %vm780, %v956, 0.0
    %973 = vst [vmem:[#allocation10] sm:$0xff] %v957
    %974 = vst [vmem:[#allocation10 + $0x8] sm:$0xff] %v958
    %975 = vst [vmem:[#allocation10 + $0x10] sm:$0xff] %v959
    %976 = vst [vmem:[#allocation10 + $0x18] sm:$0xff] %v960
    %977 = vst [vmem:[#allocation10 + $0x20] sm:$0xff] %v961
    %978 = vst [vmem:[#allocation10 + $0x28] sm:$0xff] %v962
    %979 = vst [vmem:[#allocation10 + $0x30] sm:$0xff] %v963
    %980 = vst [vmem:[#allocation10 + $0x38] sm:$0xff] %v964
    %981 = vst [vmem:[#allocation10 + $0x40] sm:$0xff] %v965
    %982 = vst [vmem:[#allocation10 + $0x48] sm:$0xff] %v966
    %983 = vst [vmem:[#allocation10 + $0x50] sm:$0xff] %v967
    %984 = vst [vmem:[#allocation10 + $0x58] sm:$0xff] %v968
    %985 = vst [vmem:[#allocation10 + $0x60] sm:$0xff] %v969
    %986 = vst [vmem:[#allocation10 + $0x68] sm:$0xff] %v970
    %987 = vst [vmem:[#allocation10 + $0x70] sm:$0xff] %v971
    %988 = vst [vmem:[#allocation10 + $0x78] sm:$0xff] %v972
    // Predicated region
    $region42: #{tpu_custom_call.1} parent=1 // pred_check
      _
    $region43: #{tpu_custom_call.1} parent=1 // pred_check_branch
      %990 = sbr.rel (0) target = $region45
    $region44: #{tpu_custom_call.1} parent=1 // pred_region
      %s992 = ssub.s32 2048, 2048
      %993 = vsyncadd [#allocation4], %s992
      %s994 = sshll.u32 [#allocation10], 4
      %s995 = int_to_ptr.vmem [resolvable:$true] %s994
      %1000 = dma.vmem_to_hbm [thread:$0]  %s995, 2048, %s6, [#allocation4], 128, 128, 8
    $region45: #{tpu_custom_call.1} parent=1 // pred_fallthru
      _
    // Predicated region
    $region46: #{tpu_custom_call.1} parent=1 // pred_check
      _
    $region47: #{tpu_custom_call.1} parent=1 // pred_check_branch
      %1002 = sbr.rel (0) target = $region49
    $region48: #{tpu_custom_call.1} parent=1 // pred_region
      %1003 = dma.done [#allocation4], 2048
    $region49: #{tpu_custom_call.1} parent=1 // pred_fallthru
      _
    %1004 = vsyncpa [#allocation3], 1
    %1005 = vsyncpa [#allocation6], 1
    %1006 = vsyncpa [#allocation9], 1
    %1007 = vsyncpa [#allocation4], 1

</llo_original>
